<compile_context>
chip_gen: v6e
topology: v6e:2x2x1
jax: 0.10.0
libtpu: 0.0.40
codegen_flags: <defaults>
</compile_context>

<pallas_src>
import math

import jax
import jax.numpy as jnp
from jax.experimental import pallas as pl
from jax.experimental.pallas import tpu as pltpu


# ---------------------------------------------------------------------------
# Kernel: one full GRU sequence per grid step (recurrence inside the kernel).
# ---------------------------------------------------------------------------
def gru_seq_kernel(xseq_ref, h0_ref, wx_ref, b_ref, whz_ref, whr_ref, whn_ref,
                   hseq_ref, xproj_ref, h_ref):
    T, B, F = xseq_ref.shape
    H = h0_ref.shape[-1]

    # ---- Phase 1: hoisted x-projection — one MXU matmul covering all T steps. ----
    # Columns are [z | r | n] pre-activations; (x-bias + h-bias) folded in offline.
    x_flat = xseq_ref[...].reshape(T * B, F)
    xp = jnp.dot(x_flat, wx_ref[...], preferred_element_type=jnp.float32) + b_ref[...]
    xp = xp.reshape(T, B, 3 * H)
    # Split the gates ONCE (outside the serial loop) so per-step reads are lane-dense
    # (B, H) tiles instead of lane-misaligned slices of a (B, 3H) row.
    xproj_ref[0] = xp[:, :, 0:H]
    xproj_ref[1] = xp[:, :, H:2 * H]
    xproj_ref[2] = xp[:, :, 2 * H:3 * H]

    # ---- Phase 2: serial recurrence. h lives in VMEM scratch; weights in vregs. ----
    h_ref[...] = h0_ref[...].astype(jnp.float32)
    whz = whz_ref[...]
    whr = whr_ref[...]
    whn = whn_ref[...]

    def step(t, carry):
        h = h_ref[...]
        zt = jax.nn.sigmoid(
            xproj_ref[0, t] + jnp.dot(h, whz, preferred_element_type=jnp.float32))
        # NOTE: reset gate intentionally uses tanh (not sigmoid) to match the module.
        rt = jnp.tanh(
            xproj_ref[1, t] + jnp.dot(h, whr, preferred_element_type=jnp.float32))
        n = jnp.tanh(
            xproj_ref[2, t] + jnp.dot(rt * h, whn, preferred_element_type=jnp.float32))
        hy = h + zt * (n - h)                      # == (1 - zt) * h + zt * n
        h_ref[...] = hy
        hseq_ref[t] = hy.astype(hseq_ref.dtype)    # output block stays VMEM-resident
        return carry

    # Small static T: full unroll gives the LLO scheduler the whole recurrence.
    jax.lax.fori_loop(0, T, step, 0, unroll=True)


# ---------------------------------------------------------------------------
# Wrappers.
# ---------------------------------------------------------------------------
def gru_sequence_batched(x_seqs, h0s, packed):
    """S independent sequences: x_seqs (S, T, B, F), h0s (S, B, H) -> (S, T, B, H)."""
    S, T, B, F = x_seqs.shape
    H = h0s.shape[-1]
    # TODO(synk): for very long T / large H, the whole-sequence VMEM residency should
    # switch to a tiled plan (v7x has only 64 MiB VMEM per TC); fine at these shapes.
    return pl.pallas_call(
        gru_seq_kernel,
        out_shape=jax.ShapeDtypeStruct((S, T, B, H), x_seqs.dtype),
        grid=(S,),
        in_specs=[
            pl.BlockSpec((None, T, B, F), lambda s: (s, 0, 0, 0)),   # per-seq inputs
            pl.BlockSpec((None, B, H), lambda s: (s, 0, 0)),         # per-seq h0
            pl.BlockSpec((F, 3 * H), lambda s: (0, 0)),              # W_x  (resident)
            pl.BlockSpec((1, 3 * H), lambda s: (0, 0)),              # bias (resident)
            pl.BlockSpec((H, H), lambda s: (0, 0)),                  # W_hz (resident)
            pl.BlockSpec((H, H), lambda s: (0, 0)),                  # W_hr (resident)
            pl.BlockSpec((H, H), lambda s: (0, 0)),                  # W_hn (resident)
        ],
        out_specs=pl.BlockSpec((None, T, B, H), lambda s: (s, 0, 0, 0)),
        scratch_shapes=[
            pltpu.VMEM((3, T, B, H), jnp.float32),   # hoisted x projections (z, r, n)
            pltpu.VMEM((B, H), jnp.float32),         # recurrent carry h
        ],
        compiler_params=pltpu.CompilerParams(
            # Independent sequences (e.g. fwd/bwd directions) shard across TensorCores.
            dimension_semantics=("parallel",),
            vmem_limit_bytes=32 * 1024 * 1024,
        ),
    )(x_seqs, h0s, packed["w_x"], packed["b"],
      packed["w_hz"], packed["w_hr"], packed["w_hn"])


def gru_sequence(x_seq, h0, packed):
    """One sequence (T, B, F) -> all hidden states (T, B, H)."""
    return gru_sequence_batched(x_seq[None], h0[None], packed)[0]


def gru_cell(x, hx, packed):
    """One GRU step (the module's forward), routed through the sequence kernel (T=1)."""
    B = x.shape[0]
    H = packed["w_hz"].shape[0]
    if hx is None:
        hx = jnp.zeros((B, H), dtype=x.dtype)
    return gru_sequence(x[None], hx, packed)[0]


# ---------------------------------------------------------------------------
# Parameter init (PyTorch-style, per-gate) and offline fusion/packing.
# ---------------------------------------------------------------------------
def init_params(key, input_size, hidden_size, dtype=jnp.float32):
    """U(-1/sqrt(H), 1/sqrt(H)) init; weights stored PRE-TRANSPOSED (in_features, H)."""
    std = 1.0 / math.sqrt(hidden_size)
    names_in = [("w_x2h", input_size), ("w_h2h", hidden_size),
                ("w_x2r", input_size), ("w_h2r", hidden_size),
                ("w_x2n", input_size), ("w_h2n", hidden_size)]
    params = {}
    keys = jax.random.split(key, 12)
    for i, (name, fan_in) in enumerate(names_in):
        params[name] = jax.random.uniform(keys[i], (fan_in, hidden_size),
                                          dtype=dtype, minval=-std, maxval=std)
        bname = "b" + name[1:]
        params[bname] = jax.random.uniform(keys[6 + i], (1, hidden_size),
                                           dtype=dtype, minval=-std, maxval=std)
    return params


def pack_params(params):
    """Fuse offline: x-path weights into one (F, 3H) matmul (+ one bias row with the
    h-path biases folded in); h-path weights kept as three separate (H, H) blocks so the
    in-loop dots and gate reads stay lane-dense (no misaligned slicing, no concat)."""
    w_x = jnp.concatenate([params["w_x2h"], params["w_x2r"], params["w_x2n"]], axis=1)
    b = jnp.concatenate([params["b_x2h"] + params["b_h2h"],
                         params["b_x2r"] + params["b_h2r"],
                         params["b_x2n"] + params["b_h2n"]], axis=1)       # (1, 3H)
    return {"w_x": w_x, "b": b,
            "w_hz": params["w_h2h"], "w_hr": params["w_h2r"], "w_hn": params["w_h2n"]}


# ---------------------------------------------------------------------------
# Pure-JAX references (exact original formulation, unfused params).
# ---------------------------------------------------------------------------
def gru_cell_ref(x, hx, params):
    def lin(a, w, b):
        return a @ w + b
    zt = jax.nn.sigmoid(lin(x, params["w_x2h"], params["b_x2h"]) +
                        lin(hx, params["w_h2h"], params["b_h2h"]))
    rt = jnp.tanh(lin(x, params["w_x2r"], params["b_x2r"]) +
                  lin(hx, params["w_h2r"], params["b_h2r"]))
    inpt_ht = jnp.tanh(lin(rt * hx, params["w_h2n"], params["b_h2n"]) +
                       lin(x, params["w_x2n"], params["b_x2n"]))
    return (1.0 - zt) * hx + zt * inpt_ht


def gru_sequence_ref(x_seq, h0, params):
    h = h0
    outs = []
    for t in range(x_seq.shape[0]):
        h = gru_cell_ref(x_seq[t], h, params)
        outs.append(h)
    return jnp.stack(outs, axis=0)


if __name__ == "__main__":
    B, INPUT_SIZE, HIDDEN_SIZE, T, S = 8, 16, 32, 12, 2

    key = jax.random.PRNGKey(0)
    kx, kh, kp, ks, kb, khb = jax.random.split(key, 6)
    x = jax.random.normal(kx, (B, INPUT_SIZE), dtype=jnp.float32)
    hx = jax.random.normal(kh, (B, HIDDEN_SIZE), dtype=jnp.float32)
    x_seq = jax.random.normal(ks, (T, B, INPUT_SIZE), dtype=jnp.float32)
    x_seqs = jax.random.normal(kb, (S, T, B, INPUT_SIZE), dtype=jnp.float32)
    h0s = jax.random.normal(khb, (S, B, HIDDEN_SIZE), dtype=jnp.float32)

    params = init_params(kp, INPUT_SIZE, HIDDEN_SIZE)
    packed = pack_params(params)

    # 1) Single-step cell (the module's forward).
    out = jax.block_until_ready(gru_cell(x, hx, packed))
    ref = gru_cell_ref(x, hx, params)
    assert out.shape == (B, HIDDEN_SIZE)
    assert jnp.allclose(out, ref, atol=5e-5, rtol=1e-4), "single-step mismatch"

    # 2) Full sequence, recurrence inside the kernel, weights VMEM-resident.
    hs = jax.block_until_ready(gru_sequence(x_seq, hx, packed))
    hs_ref = gru_sequence_ref(x_seq, hx, params)
    assert hs.shape == (T, B, HIDDEN_SIZE)
    assert jnp.allclose(hs, hs_ref, atol=1e-4, rtol=1e-4), "sequence mismatch"

    # 3) Independent sequences on a parallel grid axis (e.g. bidirectional fwd/bwd).
    hbs = jax.block_until_ready(gru_sequence_batched(x_seqs, h0s, packed))
    hbs_ref = jnp.stack([gru_sequence_ref(x_seqs[s], h0s[s], params) for s in range(S)])
    assert hbs.shape == (S, T, B, HIDDEN_SIZE)
    assert jnp.allclose(hbs, hbs_ref, atol=1e-4, rtol=1e-4), "batched-sequence mismatch"

    print("KERNEL_OK")
</pallas_src>

<mosaic_0001>
module attributes {stable_mosaic.version = 11 : i64} {
  func.func @gru_seq_kernel(%arg0: i32, %arg1: memref<1x1x8x16xf32, #tpu.memory_space<vmem>>, %arg2: memref<1x8x32xf32, #tpu.memory_space<vmem>>, %arg3: memref<16x96xf32, #tpu.memory_space<vmem>>, %arg4: memref<1x96xf32, #tpu.memory_space<vmem>>, %arg5: memref<32x32xf32, #tpu.memory_space<vmem>>, %arg6: memref<32x32xf32, #tpu.memory_space<vmem>>, %arg7: memref<32x32xf32, #tpu.memory_space<vmem>>, %arg8: memref<1x1x8x32xf32, #tpu.memory_space<vmem>>, %arg9: memref<3x1x8x32xf32, #tpu.memory_space<vmem>>, %arg10: memref<8x32xf32, #tpu.memory_space<vmem>>) attributes {dimension_semantics = [#tpu.dimension_semantics<parallel>], iteration_bounds = array<i64: 1>, scalar_prefetch = 0 : i64, scratch_operands = 2 : i64, tpu.core_type = #tpu.core_type<tc>, window_params = [{transform_indices = @transform_0, window_bounds = array<i64: 1, 1, 8, 16>}, {transform_indices = @transform_1, window_bounds = array<i64: 1, 8, 32>}, {pipeline_mode = #tpu.pipeline_mode<synchronous>, transform_indices = @transform_2, window_bounds = array<i64: 16, 96>}, {pipeline_mode = #tpu.pipeline_mode<synchronous>, transform_indices = @transform_3, window_bounds = array<i64: 1, 96>}, {pipeline_mode = #tpu.pipeline_mode<synchronous>, transform_indices = @transform_4, window_bounds = array<i64: 32, 32>}, {pipeline_mode = #tpu.pipeline_mode<synchronous>, transform_indices = @transform_5, window_bounds = array<i64: 32, 32>}, {pipeline_mode = #tpu.pipeline_mode<synchronous>, transform_indices = @transform_6, window_bounds = array<i64: 32, 32>}, {transform_indices = @transform_7, window_bounds = array<i64: 1, 1, 8, 32>}]} {
    %c0 = arith.constant 0 : index
    %c0_0 = arith.constant 0 : index
    %c0_1 = arith.constant 0 : index
    %c0_2 = arith.constant 0 : index
    %0 = vector.load %arg1[%c0, %c0_0, %c0_1, %c0_2] : memref<1x1x8x16xf32, #tpu.memory_space<vmem>>, vector<1x1x8x16xf32>
    %1 = vector.shape_cast %0 : vector<1x1x8x16xf32> to vector<1x8x16xf32>
    %2 = vector.shape_cast %1 : vector<1x8x16xf32> to vector<8x16xf32>
    %c0_3 = arith.constant 0 : index
    %c0_4 = arith.constant 0 : index
    %3 = vector.load %arg3[%c0_3, %c0_4] : memref<16x96xf32, #tpu.memory_space<vmem>>, vector<16x96xf32>
    %cst = arith.constant dense<0.000000e+00> : vector<8x96xf32>
    %4 = tpu.matmul %2, %3, %cst {dimension_numbers = #tpu.dot_dimension_numbers<[1], [0], [0], [1], [0, 0, 1, 1], [], []>} : vector<8x16xf32>, vector<16x96xf32>, vector<8x96xf32> -> vector<8x96xf32>
    %c0_5 = arith.constant 0 : index
    %c0_6 = arith.constant 0 : index
    %5 = vector.load %arg4[%c0_5, %c0_6] : memref<1x96xf32, #tpu.memory_space<vmem>>, vector<1x96xf32>
    %6 = vector.broadcast %5 : vector<1x96xf32> to vector<8x96xf32>
    %7 = arith.addf %4, %6 : vector<8x96xf32>
    %8 = vector.shape_cast %7 : vector<8x96xf32> to vector<1x8x96xf32>
    %9 = vector.extract_strided_slice %8 {offsets = [0, 0, 0], sizes = [1, 8, 32], strides = [1, 1, 1]} : vector<1x8x96xf32> to vector<1x8x32xf32>
    %c0_7 = arith.constant 0 : index
    %c0_8 = arith.constant 0 : index
    %c0_9 = arith.constant 0 : index
    %c0_10 = arith.constant 0 : index
    %10 = vector.load %arg9[%c0_7, %c0_8, %c0_9, %c0_10] : memref<3x1x8x32xf32, #tpu.memory_space<vmem>>, vector<1x1x8x32xf32>
    %11 = vector.shape_cast %10 : vector<1x1x8x32xf32> to vector<1x8x32xf32>
    %12 = vector.shape_cast %9 : vector<1x8x32xf32> to vector<1x1x8x32xf32>
    tpu.vector_store %arg9[%c0_7, %c0_8, %c0_9, %c0_10], %12 {strides = array<i32>} : memref<3x1x8x32xf32, #tpu.memory_space<vmem>>, vector<1x1x8x32xf32>,
    %13 = vector.extract_strided_slice %8 {offsets = [0, 0, 32], sizes = [1, 8, 32], strides = [1, 1, 1]} : vector<1x8x96xf32> to vector<1x8x32xf32>
    %c1 = arith.constant 1 : index
    %c0_11 = arith.constant 0 : index
    %c0_12 = arith.constant 0 : index
    %c0_13 = arith.constant 0 : index
    %14 = vector.load %arg9[%c1, %c0_11, %c0_12, %c0_13] : memref<3x1x8x32xf32, #tpu.memory_space<vmem>>, vector<1x1x8x32xf32>
    %15 = vector.shape_cast %14 : vector<1x1x8x32xf32> to vector<1x8x32xf32>
    %16 = vector.shape_cast %13 : vector<1x8x32xf32> to vector<1x1x8x32xf32>
    tpu.vector_store %arg9[%c1, %c0_11, %c0_12, %c0_13], %16 {strides = array<i32>} : memref<3x1x8x32xf32, #tpu.memory_space<vmem>>, vector<1x1x8x32xf32>,
    %17 = vector.extract_strided_slice %8 {offsets = [0, 0, 64], sizes = [1, 8, 32], strides = [1, 1, 1]} : vector<1x8x96xf32> to vector<1x8x32xf32>
    %c2 = arith.constant 2 : index
    %c0_14 = arith.constant 0 : index
    %c0_15 = arith.constant 0 : index
    %c0_16 = arith.constant 0 : index
    %18 = vector.load %arg9[%c2, %c0_14, %c0_15, %c0_16] : memref<3x1x8x32xf32, #tpu.memory_space<vmem>>, vector<1x1x8x32xf32>
    %19 = vector.shape_cast %18 : vector<1x1x8x32xf32> to vector<1x8x32xf32>
    %20 = vector.shape_cast %17 : vector<1x8x32xf32> to vector<1x1x8x32xf32>
    tpu.vector_store %arg9[%c2, %c0_14, %c0_15, %c0_16], %20 {strides = array<i32>} : memref<3x1x8x32xf32, #tpu.memory_space<vmem>>, vector<1x1x8x32xf32>,
    %c0_17 = arith.constant 0 : index
    %c0_18 = arith.constant 0 : index
    %c0_19 = arith.constant 0 : index
    %21 = vector.load %arg2[%c0_17, %c0_18, %c0_19] : memref<1x8x32xf32, #tpu.memory_space<vmem>>, vector<1x8x32xf32>
    %22 = vector.shape_cast %21 : vector<1x8x32xf32> to vector<8x32xf32>
    %c0_20 = arith.constant 0 : index
    %c0_21 = arith.constant 0 : index
    %23 = vector.load %arg10[%c0_20, %c0_21] : memref<8x32xf32, #tpu.memory_space<vmem>>, vector<8x32xf32>
    tpu.vector_store %arg10[%c0_20, %c0_21], %22 {strides = array<i32>} : memref<8x32xf32, #tpu.memory_space<vmem>>, vector<8x32xf32>,
    %c0_22 = arith.constant 0 : index
    %c0_23 = arith.constant 0 : index
    %24 = vector.load %arg5[%c0_22, %c0_23] : memref<32x32xf32, #tpu.memory_space<vmem>>, vector<32x32xf32>
    %c0_24 = arith.constant 0 : index
    %c0_25 = arith.constant 0 : index
    %25 = vector.load %arg6[%c0_24, %c0_25] : memref<32x32xf32, #tpu.memory_space<vmem>>, vector<32x32xf32>
    %c0_26 = arith.constant 0 : index
    %c0_27 = arith.constant 0 : index
    %26 = vector.load %arg7[%c0_26, %c0_27] : memref<32x32xf32, #tpu.memory_space<vmem>>, vector<32x32xf32>
    %c0_i32 = arith.constant 0 : i32
    %c0_28 = arith.constant 0 : index
    %c0_29 = arith.constant 0 : index
    %27 = vector.load %arg10[%c0_28, %c0_29] : memref<8x32xf32, #tpu.memory_space<vmem>>, vector<8x32xf32>
    %c0_30 = arith.constant 0 : index
    %28 = arith.index_cast %c0_i32 : i32 to index
    %c0_31 = arith.constant 0 : index
    %c0_32 = arith.constant 0 : index
    %29 = vector.load %arg9[%c0_30, %28, %c0_31, %c0_32] : memref<3x1x8x32xf32, #tpu.memory_space<vmem>>, vector<1x1x8x32xf32>
    %30 = vector.shape_cast %29 : vector<1x1x8x32xf32> to vector<8x32xf32>
    %cst_33 = arith.constant dense<0.000000e+00> : vector<8x32xf32>
    %31 = tpu.matmul %27, %24, %cst_33 {dimension_numbers = #tpu.dot_dimension_numbers<[1], [0], [0], [1], [0, 0, 1, 1], [], []>} : vector<8x32xf32>, vector<32x32xf32>, vector<8x32xf32> -> vector<8x32xf32>
    %32 = arith.addf %30, %31 : vector<8x32xf32>
    %33 = arith.negf %32 : vector<8x32xf32>
    %34 = math.exp %33 : vector<8x32xf32>
    %cst_34 = arith.constant 1.000000e+00 : f32
    %35 = vector.broadcast %cst_34 : f32 to vector<8x32xf32>
    %36 = arith.addf %35, %34 : vector<8x32xf32>
    %37 = arith.divf %35, %36 : vector<8x32xf32>
    %c1_35 = arith.constant 1 : index
    %38 = arith.index_cast %c0_i32 : i32 to index
    %c0_36 = arith.constant 0 : index
    %c0_37 = arith.constant 0 : index
    %39 = vector.load %arg9[%c1_35, %38, %c0_36, %c0_37] : memref<3x1x8x32xf32, #tpu.memory_space<vmem>>, vector<1x1x8x32xf32>
    %40 = vector.shape_cast %39 : vector<1x1x8x32xf32> to vector<8x32xf32>
    %cst_38 = arith.constant dense<0.000000e+00> : vector<8x32xf32>
    %41 = tpu.matmul %27, %25, %cst_38 {dimension_numbers = #tpu.dot_dimension_numbers<[1], [0], [0], [1], [0, 0, 1, 1], [], []>} : vector<8x32xf32>, vector<32x32xf32>, vector<8x32xf32> -> vector<8x32xf32>
    %42 = arith.addf %40, %41 : vector<8x32xf32>
    %43 = math.tanh %42 : vector<8x32xf32>
    %c2_39 = arith.constant 2 : index
    %44 = arith.index_cast %c0_i32 : i32 to index
    %c0_40 = arith.constant 0 : index
    %c0_41 = arith.constant 0 : index
    %45 = vector.load %arg9[%c2_39, %44, %c0_40, %c0_41] : memref<3x1x8x32xf32, #tpu.memory_space<vmem>>, vector<1x1x8x32xf32>
    %46 = vector.shape_cast %45 : vector<1x1x8x32xf32> to vector<8x32xf32>
    %47 = arith.mulf %43, %27 : vector<8x32xf32>
    %cst_42 = arith.constant dense<0.000000e+00> : vector<8x32xf32>
    %48 = tpu.matmul %47, %26, %cst_42 {dimension_numbers = #tpu.dot_dimension_numbers<[1], [0], [0], [1], [0, 0, 1, 1], [], []>} : vector<8x32xf32>, vector<32x32xf32>, vector<8x32xf32> -> vector<8x32xf32>
    %49 = arith.addf %46, %48 : vector<8x32xf32>
    %50 = math.tanh %49 : vector<8x32xf32>
    %51 = arith.subf %50, %27 : vector<8x32xf32>
    %52 = arith.mulf %37, %51 : vector<8x32xf32>
    %53 = arith.addf %27, %52 : vector<8x32xf32>
    %c0_43 = arith.constant 0 : index
    %c0_44 = arith.constant 0 : index
    %54 = vector.load %arg10[%c0_43, %c0_44] : memref<8x32xf32, #tpu.memory_space<vmem>>, vector<8x32xf32>
    tpu.vector_store %arg10[%c0_43, %c0_44], %53 {strides = array<i32>} : memref<8x32xf32, #tpu.memory_space<vmem>>, vector<8x32xf32>,
    %c0_45 = arith.constant 0 : index
    %55 = arith.index_cast %c0_i32 : i32 to index
    %c0_46 = arith.constant 0 : index
    %c0_47 = arith.constant 0 : index
    %56 = vector.load %arg8[%c0_45, %55, %c0_46, %c0_47] : memref<1x1x8x32xf32, #tpu.memory_space<vmem>>, vector<1x1x8x32xf32>
    %57 = vector.shape_cast %56 : vector<1x1x8x32xf32> to vector<8x32xf32>
    %58 = vector.shape_cast %53 : vector<8x32xf32> to vector<1x1x8x32xf32>
    tpu.vector_store %arg8[%c0_45, %55, %c0_46, %c0_47], %58 {strides = array<i32>} : memref<1x1x8x32xf32, #tpu.memory_space<vmem>>, vector<1x1x8x32xf32>,
    %c1_i32 = arith.constant 1 : i32
    return
  }
  func.func @transform_0(%arg0: i32) -> (i32, i32, i32, i32) {
    %c0_i32 = arith.constant 0 : i32
    %c0_i32_0 = arith.constant 0 : i32
    %c0_i32_1 = arith.constant 0 : i32
    %c0_i32_2 = arith.constant 0 : i32
    return %arg0, %c0_i32, %c0_i32_0, %c0_i32_1 : i32, i32, i32, i32
  }
  func.func @transform_1(%arg0: i32) -> (i32, i32, i32) {
    %c0_i32 = arith.constant 0 : i32
    %c0_i32_0 = arith.constant 0 : i32
    %c0_i32_1 = arith.constant 0 : i32
    return %arg0, %c0_i32, %c0_i32_0 : i32, i32, i32
  }
  func.func @transform_2(%arg0: i32) -> (i32, i32) {
    %c0_i32 = arith.constant 0 : i32
    %c0_i32_0 = arith.constant 0 : i32
    %c0_i32_1 = arith.constant 0 : i32
    return %c0_i32, %c0_i32_0 : i32, i32
  }
  func.func @transform_3(%arg0: i32) -> (i32, i32) {
    %c0_i32 = arith.constant 0 : i32
    %c0_i32_0 = arith.constant 0 : i32
    %c0_i32_1 = arith.constant 0 : i32
    return %c0_i32, %c0_i32_0 : i32, i32
  }
  func.func @transform_4(%arg0: i32) -> (i32, i32) {
    %c0_i32 = arith.constant 0 : i32
    %c0_i32_0 = arith.constant 0 : i32
    %c0_i32_1 = arith.constant 0 : i32
    return %c0_i32, %c0_i32_0 : i32, i32
  }
  func.func @transform_5(%arg0: i32) -> (i32, i32) {
    %c0_i32 = arith.constant 0 : i32
    %c0_i32_0 = arith.constant 0 : i32
    %c0_i32_1 = arith.constant 0 : i32
    return %c0_i32, %c0_i32_0 : i32, i32
  }
  func.func @transform_6(%arg0: i32) -> (i32, i32) {
    %c0_i32 = arith.constant 0 : i32
    %c0_i32_0 = arith.constant 0 : i32
    %c0_i32_1 = arith.constant 0 : i32
    return %c0_i32, %c0_i32_0 : i32, i32
  }
  func.func @transform_7(%arg0: i32) -> (i32, i32, i32, i32) {
    %c0_i32 = arith.constant 0 : i32
    %c0_i32_0 = arith.constant 0 : i32
    %c0_i32_1 = arith.constant 0 : i32
    %c0_i32_2 = arith.constant 0 : i32
    return %arg0, %c0_i32, %c0_i32_0, %c0_i32_1 : i32, i32, i32, i32
  }
}

</mosaic_0001>

<llo_original>
// kernel: tpu_custom_call.1
$region0: #{tpu_custom_call.1}
  #allocation0 [shape = 'u32[]', space=smem, size = 0x4, offset = 0x4, fixed_abs, tag = 'smem constant byte address 0x4 - core index']
  #allocation1 [shape = 'u32[144,128]{1,0:T(1,128)}', space=vmem, size = 0x12000, scoped, tag = 'internal scratch']
  #allocation2 [shape = 'f32[3,1,8,32]{3,2,1,0:T(8,128)}', space=vmem, size = 0x3000, scoped, tag = 'scratch operand']
  #allocation3 [shape = 'f32[8,32]{1,0:T(8,128)}', space=vmem, size = 0x1000, scoped, tag = 'scratch operand']
  %s0 = inlined_call_operand.hbm [shape: f32[1,1,8,16], index: 0, kind: input, shape index: {}]
  %s1 = inlined_call_operand.hbm [shape: f32[1,8,32], index: 1, kind: input, shape index: {}]
  %s2 = inlined_call_operand.hbm [shape: f32[16,96], index: 2, kind: input, shape index: {}]
  %s3 = inlined_call_operand.vmem [shape: f32[1,96], index: 3, kind: input, shape index: {}]
  %s4 = inlined_call_operand.hbm [shape: f32[32,32], index: 4, kind: input, shape index: {}]
  %s5 = inlined_call_operand.hbm [shape: f32[32,32], index: 5, kind: input, shape index: {}]
  %s6 = inlined_call_operand.hbm [shape: f32[32,32], index: 6, kind: input, shape index: {}]
  %s7 = inlined_call_operand.hbm [shape: f32[1,1,8,32], index: 7, kind: output, shape index: {}]
  %s8 = sld [smem:[#allocation0]]
  $region62: #{tpu_custom_call.1} parent=0
    _
  %s10 = ssub.s32 1, %s8
  %s11 = scalar_select 0, %s10, %s8
  $region1: #{tpu_custom_call.1} parent=0
    #allocation4 [shape = 'u8[4096]{0}', space=vmem, size = 0x1000, scoped, tag = 'input window, operand 0, single buffered']
    #allocation5 [shape = 's32[1]{0}', space=sflag, size = 0x4, scoped, tag = 'scoped memory for tpu_custom_call.1']
    #allocation6 [shape = 's32[1]{0}', space=sflag, size = 0x4, scoped, tag = 'scoped memory for tpu_custom_call.1']
    #allocation7 [shape = 'u8[4096]{0}', space=vmem, size = 0x1000, scoped, tag = 'input window, operand 1, single buffered']
    #allocation8 [shape = 's32[1]{0}', space=sflag, size = 0x4, scoped, tag = 'scoped memory for tpu_custom_call.1']
    #allocation9 [shape = 'u8[8192]{0}', space=vmem, size = 0x2000, scoped, tag = 'input window, operand 2, single buffered']
    #allocation10 [shape = 'u8[16384]{0}', space=vmem, size = 0x4000, scoped, tag = 'input window, operand 4, single buffered']
    #allocation11 [shape = 's32[1]{0}', space=sflag, size = 0x4, scoped, tag = 'scoped memory for tpu_custom_call.1']
    #allocation12 [shape = 'u8[16384]{0}', space=vmem, size = 0x4000, scoped, tag = 'input window, operand 5, single buffered']
    #allocation13 [shape = 'u8[16384]{0}', space=vmem, size = 0x4000, scoped, tag = 'input window, operand 6, single buffered']
    #allocation14 [shape = 's32[1]{0}', space=sflag, size = 0x4, scoped, tag = 'scoped memory for tpu_custom_call.1']
    #allocation15 [shape = 'u8[4096]{0}', space=vmem, size = 0x1000, scoped, tag = 'output window, operand 0, single buffered']
    %12 = vsyncpa [#allocation5], 0
    %13 = vsyncpa [#allocation8], 0
    %14 = vsyncpa [#allocation11], 0
    %15 = vsyncpa [#allocation14], 0
    %16 = vsyncpa [#allocation6], 0
    // Predicated region
    $region2: #{tpu_custom_call.1} parent=1 // pred_check
      _
    $region3: #{tpu_custom_call.1} parent=1 // pred_check_branch
      %18 = sbr.rel (0) target = $region5
    $region4: #{tpu_custom_call.1} parent=1 // pred_region
      %s20 = ssub.s32 128, 128
      %21 = vsyncadd [#allocation5], %s20
      %s23 = sshll.u32 [#allocation4], 4
      %s24 = int_to_ptr.vmem [resolvable:$true] %s23
      %26 = dma.hbm_to_vmem [thread:$0]  %s0, 128, %s24, [#allocation5]
    $region5: #{tpu_custom_call.1} parent=1 // pred_fallthru
      _
    // Predicated region
    $region6: #{tpu_custom_call.1} parent=1 // pred_check
      _
    $region7: #{tpu_custom_call.1} parent=1 // pred_check_branch
      %28 = sbr.rel (0) target = $region9
    $region8: #{tpu_custom_call.1} parent=1 // pred_region
      %s30 = ssub.s32 128, 128
      %31 = vsyncadd [#allocation8], %s30
      %s33 = sshll.u32 [#allocation7], 4
      %s34 = int_to_ptr.vmem [resolvable:$true] %s33
      %36 = dma.hbm_to_vmem [thread:$0]  %s1, 128, %s34, [#allocation8]
    $region9: #{tpu_custom_call.1} parent=1 // pred_fallthru
      _
    // Predicated region
    $region10: #{tpu_custom_call.1} parent=1 // pred_check
      _
    $region11: #{tpu_custom_call.1} parent=1 // pred_check_branch
      %38 = sbr.rel (0) target = $region13
    $region12: #{tpu_custom_call.1} parent=1 // pred_region
      %s40 = ssub.s32 256, 256
      %41 = vsyncadd [#allocation8], %s40
      %s42 = sshll.u32 [#allocation9], 4
      %s43 = int_to_ptr.vmem [resolvable:$true] %s42
      %48 = dma.hbm_to_vmem [thread:$0]  %s2, 256, %s43, [#allocation8], 128, 128, 8
    $region13: #{tpu_custom_call.1} parent=1 // pred_fallthru
      _
    // Predicated region
    $region14: #{tpu_custom_call.1} parent=1 // pred_check
      _
    $region15: #{tpu_custom_call.1} parent=1 // pred_check_branch
      %50 = sbr.rel (0) target = $region17
    $region16: #{tpu_custom_call.1} parent=1 // pred_region
      _
    $region17: #{tpu_custom_call.1} parent=1 // pred_fallthru
      _
    // Predicated region
    $region18: #{tpu_custom_call.1} parent=1 // pred_check
      _
    $region19: #{tpu_custom_call.1} parent=1 // pred_check_branch
      %52 = sbr.rel (0) target = $region21
    $region20: #{tpu_custom_call.1} parent=1 // pred_region
      %s54 = ssub.s32 512, 512
      %55 = vsyncadd [#allocation11], %s54
      %s56 = sshll.u32 [#allocation10], 4
      %s57 = int_to_ptr.vmem [resolvable:$true] %s56
      %62 = dma.hbm_to_vmem [thread:$0]  %s4, 512, %s57, [#allocation11], 128, 128, 8
    $region21: #{tpu_custom_call.1} parent=1 // pred_fallthru
      _
    // Predicated region
    $region22: #{tpu_custom_call.1} parent=1 // pred_check
      _
    $region23: #{tpu_custom_call.1} parent=1 // pred_check_branch
      %64 = sbr.rel (0) target = $region25
    $region24: #{tpu_custom_call.1} parent=1 // pred_region
      %s66 = ssub.s32 512, 512
      %67 = vsyncadd [#allocation11], %s66
      %s68 = sshll.u32 [#allocation12], 4
      %s69 = int_to_ptr.vmem [resolvable:$true] %s68
      %74 = dma.hbm_to_vmem [thread:$0]  %s5, 512, %s69, [#allocation11], 128, 128, 8
    $region25: #{tpu_custom_call.1} parent=1 // pred_fallthru
      _
    // Predicated region
    $region26: #{tpu_custom_call.1} parent=1 // pred_check
      _
    $region27: #{tpu_custom_call.1} parent=1 // pred_check_branch
      %76 = sbr.rel (0) target = $region29
    $region28: #{tpu_custom_call.1} parent=1 // pred_region
      %s78 = ssub.s32 512, 512
      %79 = vsyncadd [#allocation14], %s78
      %s80 = sshll.u32 [#allocation13], 4
      %s81 = int_to_ptr.vmem [resolvable:$true] %s80
      %86 = dma.hbm_to_vmem [thread:$0]  %s6, 512, %s81, [#allocation14], 128, 128, 8
    $region29: #{tpu_custom_call.1} parent=1 // pred_fallthru
      _
    // Predicated region
    $region30: #{tpu_custom_call.1} parent=1 // pred_check
      _
    $region31: #{tpu_custom_call.1} parent=1 // pred_check_branch
      %88 = sbr.rel (0) target = $region33
    $region32: #{tpu_custom_call.1} parent=1 // pred_region
      %89 = dma.done [#allocation5], 128
    $region33: #{tpu_custom_call.1} parent=1 // pred_fallthru
      _
    // Predicated region
    $region34: #{tpu_custom_call.1} parent=1 // pred_check
      _
    $region35: #{tpu_custom_call.1} parent=1 // pred_check_branch
      %91 = sbr.rel (0) target = $region37
    $region36: #{tpu_custom_call.1} parent=1 // pred_region
      %92 = dma.done [#allocation8], 128
    $region37: #{tpu_custom_call.1} parent=1 // pred_fallthru
      _
    // Predicated region
    $region38: #{tpu_custom_call.1} parent=1 // pred_check
      _
    $region39: #{tpu_custom_call.1} parent=1 // pred_check_branch
      %94 = sbr.rel (0) target = $region41
    $region40: #{tpu_custom_call.1} parent=1 // pred_region
      %95 = dma.done [#allocation8], 256
    $region41: #{tpu_custom_call.1} parent=1 // pred_fallthru
      _
    // Predicated region
    $region42: #{tpu_custom_call.1} parent=1 // pred_check
      _
    $region43: #{tpu_custom_call.1} parent=1 // pred_check_branch
      %97 = sbr.rel (0) target = $region45
    $region44: #{tpu_custom_call.1} parent=1 // pred_region
      %98 = dma.done [#allocation11], 512
    $region45: #{tpu_custom_call.1} parent=1 // pred_fallthru
      _
    // Predicated region
    $region46: #{tpu_custom_call.1} parent=1 // pred_check
      _
    $region47: #{tpu_custom_call.1} parent=1 // pred_check_branch
      %100 = sbr.rel (0) target = $region49
    $region48: #{tpu_custom_call.1} parent=1 // pred_region
      %101 = dma.done [#allocation11], 512
    $region49: #{tpu_custom_call.1} parent=1 // pred_fallthru
      _
    // Predicated region
    $region50: #{tpu_custom_call.1} parent=1 // pred_check
      _
    $region51: #{tpu_custom_call.1} parent=1 // pred_check_branch
      %103 = sbr.rel (0) target = $region53
    $region52: #{tpu_custom_call.1} parent=1 // pred_region
      %104 = dma.done [#allocation14], 512
    $region53: #{tpu_custom_call.1} parent=1 // pred_fallthru
      _
    %v105 = vld [vmem:[#allocation4] sm:$0xff]
    %v106 = vld [vmem:[#allocation9] sm:$0xff]
    %v107 = vld [vmem:[#allocation9 + $0x8] sm:$0xff]
    %v108 = vld [vmem:[%s3] sm:$0x1]
    %v110 = vlaneseq
    %v111 = vshrl.u32 %v110, 7
    %v112 = vsub.s32 0, %v111
    %v113 = vrot.slane %v108, %v112
    %vm115 = vcmask 130048
    %v117 = vsel %vm115, %v105, 0
    %119 = vmatprep.subr.mxu0 0.0
    %120 = vmatpush1.msra.mxu0 0.0
    %121 = vmatprep.subr.mxu0 0.0
    %122 = vmatpush1.msra.mxu0 0.0
    %123 = vmatprep.subr.mxu0 0.0
    %124 = vmatpush1.msra.mxu0 0.0
    %125 = vmatprep.subr.mxu0 0.0
    %126 = vmatpush1.msra.mxu0 0.0
    %127 = vmatprep.subr.mxu0 0.0
    %128 = vmatpush1.msra.mxu0 0.0
    %129 = vmatprep.subr.mxu0 0.0
    %130 = vmatpush1.msra.mxu0 0.0
    %131 = vmatprep.subr.mxu0 0.0
    %132 = vmatpush1.msra.mxu0 0.0
    %133 = vmatprep.subr.mxu0 0.0
    %134 = vmatpush1.msra.mxu0 0.0
    %135 = vmatprep.subr.mxu0 0.0
    %136 = vmatpush1.msra.mxu0 0.0
    %137 = vmatprep.subr.mxu0 0.0
    %138 = vmatpush1.msra.mxu0 0.0
    %139 = vmatprep.subr.mxu0 0.0
    %140 = vmatpush1.msra.mxu0 0.0
    %141 = vmatprep.subr.mxu0 0.0
    %142 = vmatpush1.msra.mxu0 0.0
    %143 = vmatprep.subr.mxu0 0.0
    %144 = vmatpush1.msra.mxu0 0.0
    %145 = vmatprep.subr.mxu0 0.0
    %146 = vmatpush1.msra.mxu0 0.0
    %147 = vmatprep.subr.mxu0 0.0
    %148 = vmatpush1.msra.mxu0 %v107
    %149 = vmatprep.subr.mxu0 0.0
    %150 = vmatpush1.msra.mxu0 %v106
    %151 = vmatprep.subr.mxu0 0.0
    %152 = vmatpush2.msra.mxu0 0.0
    %153 = vmatprep.subr.mxu0 0.0
    %154 = vmatpush2.msra.mxu0 0.0
    %155 = vmatprep.subr.mxu0 0.0
    %156 = vmatpush2.msra.mxu0 0.0
    %157 = vmatprep.subr.mxu0 0.0
    %158 = vmatpush2.msra.mxu0 0.0
    %159 = vmatprep.subr.mxu0 0.0
    %160 = vmatpush2.msra.mxu0 0.0
    %161 = vmatprep.subr.mxu0 0.0
    %162 = vmatpush2.msra.mxu0 0.0
    %163 = vmatprep.subr.mxu0 0.0
    %164 = vmatpush2.msra.mxu0 0.0
    %165 = vmatprep.subr.mxu0 0.0
    %166 = vmatpush2.msra.mxu0 0.0
    %167 = vmatprep.subr.mxu0 0.0
    %168 = vmatpush2.msra.mxu0 0.0
    %169 = vmatprep.subr.mxu0 0.0
    %170 = vmatpush2.msra.mxu0 0.0
    %171 = vmatprep.subr.mxu0 0.0
    %172 = vmatpush2.msra.mxu0 0.0
    %173 = vmatprep.subr.mxu0 0.0
    %174 = vmatpush2.msra.mxu0 0.0
    %175 = vmatprep.subr.mxu0 0.0
    %176 = vmatpush2.msra.mxu0 0.0
    %177 = vmatprep.subr.mxu0 0.0
    %178 = vmatpush2.msra.mxu0 0.0
    %179 = vmatprep.subr.mxu0 0.0
    %180 = vmatpush2.msra.mxu0 0.0
    %181 = vmatprep.subr.mxu0 0.0
    %182 = vmatpush2.msra.mxu0 0.0
    %183 = vmatprep.mubr.f32.mxu0 0.0
    %184 = vmatmul.mubr.f32.gmra.mxu0 %v117
    %v185 = vpop.f32.mrf.mxu0
    %v186 = vadd.f32 %v113, %v185
    %v187 = vpop.f32.mrf.mxu0
    %188 = vdwg.mxu0
    %vm189 = vcmask 261120
    %190 = vst.msk [vmem:[#allocation2] sm:$0xff] %vm189, %v186
    %192 = vrot.lane.b32.xlu0 %v186, 96
    %v193 = vpop.permute.xlu0 %192
    %s195 = scalar_lea.vmem [#allocation2], 8
    %196 = vst.msk [vmem:[%s195] sm:$0xff] %vm189, %v193
    %197 = vrot.lane.b32.xlu0 %v186, 64
    %v198 = vpop.permute.xlu0 %197
    %s200 = scalar_lea.vmem [#allocation2], 16
    %201 = vst.msk [vmem:[%s200] sm:$0xff] %vm189, %v198
    %v202 = vld [vmem:[#allocation7] sm:$0xff]
    %203 = vst.msk [vmem:[#allocation3] sm:$0xff] %vm189, %v202
    %v204 = vld [vmem:[#allocation10] sm:$0xff]
    %v205 = vld [vmem:[#allocation10 + $0x8] sm:$0xff]
    %v206 = vld [vmem:[#allocation10 + $0x10] sm:$0xff]
    %v207 = vld [vmem:[#allocation10 + $0x18] sm:$0xff]
    %v208 = vld [vmem:[#allocation12] sm:$0xff]
    %v209 = vld [vmem:[#allocation12 + $0x8] sm:$0xff]
    %v210 = vld [vmem:[#allocation12 + $0x10] sm:$0xff]
    %v211 = vld [vmem:[#allocation12 + $0x18] sm:$0xff]
    %v212 = vld [vmem:[#allocation13] sm:$0xff]
    %v213 = vld [vmem:[#allocation13 + $0x8] sm:$0xff]
    %v214 = vld [vmem:[#allocation13 + $0x10] sm:$0xff]
    %v215 = vld [vmem:[#allocation13 + $0x18] sm:$0xff]
    %v216 = vld [vmem:[#allocation3] sm:$0xff]
    %v217 = vld [vmem:[#allocation2] sm:$0xff]
    %v219 = vsel %vm189, %v216, 0
    %221 = vmatprep.subr.mxu0 0.0
    %222 = vmatpush1.msra.mxu0 0.0
    %223 = vmatprep.subr.mxu0 0.0
    %224 = vmatpush1.msra.mxu0 0.0
    %225 = vmatprep.subr.mxu0 0.0
    %226 = vmatpush1.msra.mxu0 0.0
    %227 = vmatprep.subr.mxu0 0.0
    %228 = vmatpush1.msra.mxu0 0.0
    %229 = vmatprep.subr.mxu0 0.0
    %230 = vmatpush1.msra.mxu0 0.0
    %231 = vmatprep.subr.mxu0 0.0
    %232 = vmatpush1.msra.mxu0 0.0
    %233 = vmatprep.subr.mxu0 0.0
    %234 = vmatpush1.msra.mxu0 0.0
    %235 = vmatprep.subr.mxu0 0.0
    %236 = vmatpush1.msra.mxu0 0.0
    %237 = vmatprep.subr.mxu0 0.0
    %238 = vmatpush1.msra.mxu0 0.0
    %239 = vmatprep.subr.mxu0 0.0
    %240 = vmatpush1.msra.mxu0 0.0
    %241 = vmatprep.subr.mxu0 0.0
    %242 = vmatpush1.msra.mxu0 0.0
    %243 = vmatprep.subr.mxu0 0.0
    %244 = vmatpush1.msra.mxu0 0.0
    %245 = vmatprep.subr.mxu0 0.0
    %246 = vmatpush1.msra.mxu0 %v207
    %247 = vmatprep.subr.mxu0 0.0
    %248 = vmatpush1.msra.mxu0 %v206
    %249 = vmatprep.subr.mxu0 0.0
    %250 = vmatpush1.msra.mxu0 %v205
    %251 = vmatprep.subr.mxu0 0.0
    %252 = vmatpush1.msra.mxu0 %v204
    %253 = vmatprep.subr.mxu0 0.0
    %254 = vmatpush2.msra.mxu0 0.0
    %255 = vmatprep.subr.mxu0 0.0
    %256 = vmatpush2.msra.mxu0 0.0
    %257 = vmatprep.subr.mxu0 0.0
    %258 = vmatpush2.msra.mxu0 0.0
    %259 = vmatprep.subr.mxu0 0.0
    %260 = vmatpush2.msra.mxu0 0.0
    %261 = vmatprep.subr.mxu0 0.0
    %262 = vmatpush2.msra.mxu0 0.0
    %263 = vmatprep.subr.mxu0 0.0
    %264 = vmatpush2.msra.mxu0 0.0
    %265 = vmatprep.subr.mxu0 0.0
    %266 = vmatpush2.msra.mxu0 0.0
    %267 = vmatprep.subr.mxu0 0.0
    %268 = vmatpush2.msra.mxu0 0.0
    %269 = vmatprep.subr.mxu0 0.0
    %270 = vmatpush2.msra.mxu0 0.0
    %271 = vmatprep.subr.mxu0 0.0
    %272 = vmatpush2.msra.mxu0 0.0
    %273 = vmatprep.subr.mxu0 0.0
    %274 = vmatpush2.msra.mxu0 0.0
    %275 = vmatprep.subr.mxu0 0.0
    %276 = vmatpush2.msra.mxu0 0.0
    %277 = vmatprep.subr.mxu0 0.0
    %278 = vmatpush2.msra.mxu0 0.0
    %279 = vmatprep.subr.mxu0 0.0
    %280 = vmatpush2.msra.mxu0 0.0
    %281 = vmatprep.subr.mxu0 0.0
    %282 = vmatpush2.msra.mxu0 0.0
    %283 = vmatprep.subr.mxu0 0.0
    %284 = vmatpush2.msra.mxu0 0.0
    %285 = vmatprep.mubr.f32.mxu0 0.0
    %286 = vmatmul.mubr.f32.gmra.mxu0 %v219
    %v287 = vpop.f32.mrf.mxu0
    %v288 = vadd.f32 0.0, %v287
    %v289 = vpop.f32.mrf.mxu0
    %290 = vdwg.mxu0
    %v291 = vadd.f32 %v217, %v288
    %v292 = vxor.u32 %v291, 2147483648
    %v293 = vmul.f32 %v292, 1.442695
    %v294 = vpow.pop %v293
    %v295 = vadd.f32 %v294, 1.0
    %v296 = vrcp.pop %v295
    %v297 = vmul.f32 1.0, %v296
    %v298 = vld [vmem:[%s195] sm:$0xff]
    %299 = vmatprep.subr.mxu0 0.0
    %300 = vmatpush1.msra.mxu0 0.0
    %301 = vmatprep.subr.mxu0 0.0
    %302 = vmatpush1.msra.mxu0 0.0
    %303 = vmatprep.subr.mxu0 0.0
    %304 = vmatpush1.msra.mxu0 0.0
    %305 = vmatprep.subr.mxu0 0.0
    %306 = vmatpush1.msra.mxu0 0.0
    %307 = vmatprep.subr.mxu0 0.0
    %308 = vmatpush1.msra.mxu0 0.0
    %309 = vmatprep.subr.mxu0 0.0
    %310 = vmatpush1.msra.mxu0 0.0
    %311 = vmatprep.subr.mxu0 0.0
    %312 = vmatpush1.msra.mxu0 0.0
    %313 = vmatprep.subr.mxu0 0.0
    %314 = vmatpush1.msra.mxu0 0.0
    %315 = vmatprep.subr.mxu0 0.0
    %316 = vmatpush1.msra.mxu0 0.0
    %317 = vmatprep.subr.mxu0 0.0
    %318 = vmatpush1.msra.mxu0 0.0
    %319 = vmatprep.subr.mxu0 0.0
    %320 = vmatpush1.msra.mxu0 0.0
    %321 = vmatprep.subr.mxu0 0.0
    %322 = vmatpush1.msra.mxu0 0.0
    %323 = vmatprep.subr.mxu0 0.0
    %324 = vmatpush1.msra.mxu0 %v211
    %325 = vmatprep.subr.mxu0 0.0
    %326 = vmatpush1.msra.mxu0 %v210
    %327 = vmatprep.subr.mxu0 0.0
    %328 = vmatpush1.msra.mxu0 %v209
    %329 = vmatprep.subr.mxu0 0.0
    %330 = vmatpush1.msra.mxu0 %v208
    %331 = vmatprep.subr.mxu0 0.0
    %332 = vmatpush2.msra.mxu0 0.0
    %333 = vmatprep.subr.mxu0 0.0
    %334 = vmatpush2.msra.mxu0 0.0
    %335 = vmatprep.subr.mxu0 0.0
    %336 = vmatpush2.msra.mxu0 0.0
    %337 = vmatprep.subr.mxu0 0.0
    %338 = vmatpush2.msra.mxu0 0.0
    %339 = vmatprep.subr.mxu0 0.0
    %340 = vmatpush2.msra.mxu0 0.0
    %341 = vmatprep.subr.mxu0 0.0
    %342 = vmatpush2.msra.mxu0 0.0
    %343 = vmatprep.subr.mxu0 0.0
    %344 = vmatpush2.msra.mxu0 0.0
    %345 = vmatprep.subr.mxu0 0.0
    %346 = vmatpush2.msra.mxu0 0.0
    %347 = vmatprep.subr.mxu0 0.0
    %348 = vmatpush2.msra.mxu0 0.0
    %349 = vmatprep.subr.mxu0 0.0
    %350 = vmatpush2.msra.mxu0 0.0
    %351 = vmatprep.subr.mxu0 0.0
    %352 = vmatpush2.msra.mxu0 0.0
    %353 = vmatprep.subr.mxu0 0.0
    %354 = vmatpush2.msra.mxu0 0.0
    %355 = vmatprep.subr.mxu0 0.0
    %356 = vmatpush2.msra.mxu0 0.0
    %357 = vmatprep.subr.mxu0 0.0
    %358 = vmatpush2.msra.mxu0 0.0
    %359 = vmatprep.subr.mxu0 0.0
    %360 = vmatpush2.msra.mxu0 0.0
    %361 = vmatprep.subr.mxu0 0.0
    %362 = vmatpush2.msra.mxu0 0.0
    %363 = vmatprep.mubr.f32.mxu0 0.0
    %364 = vmatmul.mubr.f32.gmra.mxu0 %v219
    %v365 = vpop.f32.mrf.mxu0
    %v366 = vadd.f32 0.0, %v365
    %v367 = vpop.f32.mrf.mxu0
    %368 = vdwg.mxu0
    %v369 = vadd.f32 %v298, %v366
    %v370 = vtanh.pop %v369
    %v371 = vld [vmem:[%s200] sm:$0xff]
    %v372 = vmul.f32 %v370, %v216
    %v374 = vsel %vm189, %v372, 0
    %376 = vmatprep.subr.mxu0 0.0
    %377 = vmatpush1.msra.mxu0 0.0
    %378 = vmatprep.subr.mxu0 0.0
    %379 = vmatpush1.msra.mxu0 0.0
    %380 = vmatprep.subr.mxu0 0.0
    %381 = vmatpush1.msra.mxu0 0.0
    %382 = vmatprep.subr.mxu0 0.0
    %383 = vmatpush1.msra.mxu0 0.0
    %384 = vmatprep.subr.mxu0 0.0
    %385 = vmatpush1.msra.mxu0 0.0
    %386 = vmatprep.subr.mxu0 0.0
    %387 = vmatpush1.msra.mxu0 0.0
    %388 = vmatprep.subr.mxu0 0.0
    %389 = vmatpush1.msra.mxu0 0.0
    %390 = vmatprep.subr.mxu0 0.0
    %391 = vmatpush1.msra.mxu0 0.0
    %392 = vmatprep.subr.mxu0 0.0
    %393 = vmatpush1.msra.mxu0 0.0
    %394 = vmatprep.subr.mxu0 0.0
    %395 = vmatpush1.msra.mxu0 0.0
    %396 = vmatprep.subr.mxu0 0.0
    %397 = vmatpush1.msra.mxu0 0.0
    %398 = vmatprep.subr.mxu0 0.0
    %399 = vmatpush1.msra.mxu0 0.0
    %400 = vmatprep.subr.mxu0 0.0
    %401 = vmatpush1.msra.mxu0 %v215
    %402 = vmatprep.subr.mxu0 0.0
    %403 = vmatpush1.msra.mxu0 %v214
    %404 = vmatprep.subr.mxu0 0.0
    %405 = vmatpush1.msra.mxu0 %v213
    %406 = vmatprep.subr.mxu0 0.0
    %407 = vmatpush1.msra.mxu0 %v212
    %408 = vmatprep.subr.mxu0 0.0
    %409 = vmatpush2.msra.mxu0 0.0
    %410 = vmatprep.subr.mxu0 0.0
    %411 = vmatpush2.msra.mxu0 0.0
    %412 = vmatprep.subr.mxu0 0.0
    %413 = vmatpush2.msra.mxu0 0.0
    %414 = vmatprep.subr.mxu0 0.0
    %415 = vmatpush2.msra.mxu0 0.0
    %416 = vmatprep.subr.mxu0 0.0
    %417 = vmatpush2.msra.mxu0 0.0
    %418 = vmatprep.subr.mxu0 0.0
    %419 = vmatpush2.msra.mxu0 0.0
    %420 = vmatprep.subr.mxu0 0.0
    %421 = vmatpush2.msra.mxu0 0.0
    %422 = vmatprep.subr.mxu0 0.0
    %423 = vmatpush2.msra.mxu0 0.0
    %424 = vmatprep.subr.mxu0 0.0
    %425 = vmatpush2.msra.mxu0 0.0
    %426 = vmatprep.subr.mxu0 0.0
    %427 = vmatpush2.msra.mxu0 0.0
    %428 = vmatprep.subr.mxu0 0.0
    %429 = vmatpush2.msra.mxu0 0.0
    %430 = vmatprep.subr.mxu0 0.0
    %431 = vmatpush2.msra.mxu0 0.0
    %432 = vmatprep.subr.mxu0 0.0
    %433 = vmatpush2.msra.mxu0 0.0
    %434 = vmatprep.subr.mxu0 0.0
    %435 = vmatpush2.msra.mxu0 0.0
    %436 = vmatprep.subr.mxu0 0.0
    %437 = vmatpush2.msra.mxu0 0.0
    %438 = vmatprep.subr.mxu0 0.0
    %439 = vmatpush2.msra.mxu0 0.0
    %440 = vmatprep.mubr.f32.mxu0 0.0
    %441 = vmatmul.mubr.f32.gmra.mxu0 %v374
    %v442 = vpop.f32.mrf.mxu0
    %v443 = vadd.f32 0.0, %v442
    %v444 = vpop.f32.mrf.mxu0
    %445 = vdwg.mxu0
    %v446 = vadd.f32 %v371, %v443
    %v447 = vtanh.pop %v446
    %v448 = vsub.f32 %v447, %v216
    %v449 = vmul.f32 %v297, %v448
    %v450 = vadd.f32 %v216, %v449
    %451 = vst.msk [vmem:[#allocation3] sm:$0xff] %vm189, %v450
    %452 = vst.msk [vmem:[#allocation15] sm:$0xff] %vm189, %v450
    // Predicated region
    $region54: #{tpu_custom_call.1} parent=1 // pred_check
      _
    $region55: #{tpu_custom_call.1} parent=1 // pred_check_branch
      %454 = sbr.rel (0) target = $region57
    $region56: #{tpu_custom_call.1} parent=1 // pred_region
      %s456 = ssub.s32 128, 128
      %457 = vsyncadd [#allocation6], %s456
      %s459 = sshll.u32 [#allocation15], 4
      %s460 = int_to_ptr.vmem [resolvable:$true] %s459
      %462 = dma.vmem_to_hbm [thread:$0]  %s460, 128, %s7, [#allocation6]
    $region57: #{tpu_custom_call.1} parent=1 // pred_fallthru
      _
    // Predicated region
    $region58: #{tpu_custom_call.1} parent=1 // pred_check
      _
    $region59: #{tpu_custom_call.1} parent=1 // pred_check_branch
      %464 = sbr.rel (0) target = $region61
    $region60: #{tpu_custom_call.1} parent=1 // pred_region
      %465 = dma.done [#allocation6], 128
    $region61: #{tpu_custom_call.1} parent=1 // pred_fallthru
      _
    %466 = vsyncpa [#allocation5], 1
    %467 = vsyncpa [#allocation8], 1
    %468 = vsyncpa [#allocation11], 1
    %469 = vsyncpa [#allocation14], 1
    %470 = vsyncpa [#allocation6], 1

</llo_original>
